<compile_context>
chip_gen: v5e
topology: v5e:2x2
jax: 0.10.0
libtpu: 0.0.40
codegen_flags: <defaults>
</compile_context>

<pallas_src>
import functools

import jax
import jax.numpy as jnp
from jax.experimental import pallas as pl
from jax.experimental.pallas import tpu as pltpu

EPS = 1e-5  # nn.BatchNorm2d default eps


def _round_up(a, b):
    return ((a + b - 1) // b) * b


# ---------------------------------------------------------------------------
# Pass 1: conv-as-matmul (transposed, lane-dense) + per-tile BN partial stats
# ---------------------------------------------------------------------------
def conv_stats_kernel(w_ref, x_ref, y_ref, psum_ref, psq_ref):
    # w_ref:    (C, Kp)   bf16, VMEM-resident across the grid
    # x_ref:    (Kp, tm)  bf16, one im2col^T tile (pipelined)
    # y_ref:    (C, tm)   f32, pre-BN conv output (lane-dense)
    # psum_ref: (1, C, 1) f32, this tile's per-channel sum over M
    # psq_ref:  (1, C, 1) f32, this tile's per-channel sum of squares over M
    y = jnp.dot(w_ref[...], x_ref[...], preferred_element_type=jnp.float32)
    y_ref[...] = y
    # Lane-axis (XLU) reductions -> per-channel partial statistics.
    psum_ref[0, :, :] = jnp.sum(y, axis=1, keepdims=True)
    psq_ref[0, :, :] = jnp.sum(y * y, axis=1, keepdims=True)


def conv_stats_pallas(w_t, x_t, tm):
    C, Kp = w_t.shape
    _, Mp = x_t.shape
    n_tiles = Mp // tm
    cost = pl.CostEstimate(
        flops=2 * Mp * Kp * C,
        transcendentals=0,
        bytes_accessed=(x_t.size * 2 + w_t.size * 2
                        + C * Mp * 4 + 2 * n_tiles * C * 4),
    )
    return pl.pallas_call(
        conv_stats_kernel,
        out_shape=(
            jax.ShapeDtypeStruct((C, Mp), jnp.float32),
            jax.ShapeDtypeStruct((n_tiles, C, 1), jnp.float32),
            jax.ShapeDtypeStruct((n_tiles, C, 1), jnp.float32),
        ),
        grid=(n_tiles,),
        in_specs=[
            pl.BlockSpec((C, Kp), lambda i: (0, 0)),    # W^T: resident
            pl.BlockSpec((Kp, tm), lambda i: (0, i)),   # X^T tile (pipelined)
            # TODO(synk): if an xprof trace on v6e shows exposed DMA, deepen
            # the X pipeline with pipeline_mode=pl.Buffered(3) on the X spec.
        ],
        out_specs=(
            pl.BlockSpec((C, tm), lambda i: (0, i)),
            pl.BlockSpec((1, C, 1), lambda i: (i, 0, 0)),
            pl.BlockSpec((1, C, 1), lambda i: (i, 0, 0)),
        ),
        compiler_params=pltpu.CompilerParams(
            dimension_semantics=("parallel",),          # no cross-tile carry
            vmem_limit_bytes=32 * 1024 * 1024,          # safe on v7x (64 MiB)
        ),
        cost_estimate=cost,
    )(w_t, x_t)


# ---------------------------------------------------------------------------
# Pass 2: apply BatchNorm (folded to scale/shift) + ReLU, lane-dense
# ---------------------------------------------------------------------------
def bn_relu_kernel(scale_ref, shift_ref, y_ref, o_ref):
    # scale/shift: (C, 1) f32 resident; y/o: (C, tm) f32 lane-dense tiles.
    o_ref[...] = jnp.maximum(y_ref[...] * scale_ref[...] + shift_ref[...], 0.0)


def bn_relu_pallas(scale, shift, y_t, tm):
    C, Mp = y_t.shape
    n_tiles = Mp // tm
    return pl.pallas_call(
        bn_relu_kernel,
        out_shape=jax.ShapeDtypeStruct((C, Mp), jnp.float32),
        grid=(n_tiles,),
        in_specs=[
            pl.BlockSpec((C, 1), lambda i: (0, 0)),
            pl.BlockSpec((C, 1), lambda i: (0, 0)),
            pl.BlockSpec((C, tm), lambda i: (0, i)),
        ],
        out_specs=pl.BlockSpec((C, tm), lambda i: (0, i)),
        compiler_params=pltpu.CompilerParams(
            dimension_semantics=("parallel",),
            vmem_limit_bytes=32 * 1024 * 1024,
        ),
    )(scale, shift, y_t)


# ---------------------------------------------------------------------------
# Plain-JAX glue (runs inside the same jit as the pallas_calls)
# ---------------------------------------------------------------------------
def im2col(x_nchw, kh, kw, stride, padding):
    """NCHW -> [N*Ho*Wo, C_in*kh*kw], K flattened (c, i, j) to match OIHW."""
    N, Cin, H, W = x_nchw.shape
    Ho = (H + 2 * padding - kh) // stride + 1
    Wo = (W + 2 * padding - kw) // stride + 1
    xp = jnp.pad(x_nchw, ((0, 0), (0, 0), (padding, padding), (padding, padding)))
    xp = jnp.transpose(xp, (0, 2, 3, 1))  # NHWC for patch slicing
    cols = []
    for i in range(kh):
        for j in range(kw):
            cols.append(xp[:, i:i + Ho * stride:stride, j:j + Wo * stride:stride, :])
    patches = jnp.stack(cols, axis=-1)  # [N, Ho, Wo, C_in, kh*kw]
    return patches.reshape(N * Ho * Wo, Cin * kh * kw), (N, Ho, Wo)


@functools.partial(jax.jit, static_argnames=("stride", "padding", "block_m"))
def convolution_layer_forward(x, weight, bias, gamma, beta,
                              stride=1, padding=1, block_m=512):
    """ConvolutionLayer(dim=2, norm_type='batch_norm', acti_func=ReLU).forward."""
    del bias  # conv bias before training-mode BatchNorm cancels exactly
    Cout, Cin, kh, kw = weight.shape

    # im2col stays inside this jit so XLA fuses the expansion with its
    # pad/transpose producers (no extra standalone HBM round trip).
    # TODO(synk): fuse the 3x3 expansion into the kernel (halo row-band tiles,
    # 9 shifted dot-accumulations) to cut the remaining ~9x im2col DMA.
    x_mat, (N, Ho, Wo) = im2col(x, kh, kw, stride, padding)
    M, K = x_mat.shape

    # Lane-aligned padding: K -> multiple of 8, M -> multiple of the M tile.
    Kp = _round_up(K, 8)
    tm = _round_up(min(block_m, _round_up(M, 128)), 128)
    Mp = _round_up(M, tm)

    # Transposed bf16 matmul operands (lane-dense output, half the DMA bytes).
    x_t = jnp.pad(x_mat, ((0, Mp - M), (0, Kp - K))).T.astype(jnp.bfloat16)  # (Kp, Mp)
    w_t = jnp.pad(weight.reshape(Cout, K),
                  ((0, 0), (0, Kp - K))).astype(jnp.bfloat16)                # (C, Kp)

    # Pass 1: conv + per-tile BN partial stats (padded columns are exact zeros,
    # so they contribute nothing to the partial sums).
    y_t, psum, psq = conv_stats_pallas(w_t, x_t, tm)

    # Tiny per-channel combine (C_out numbers) -> folded BN scale/shift.
    s = jnp.sum(psum, axis=0)[:, 0]                      # (C,)
    ss = jnp.sum(psq, axis=0)[:, 0]                      # (C,)
    mean = s / M                                         # biased batch stats
    var = jnp.maximum(ss / M - mean * mean, 0.0)
    inv = jax.lax.rsqrt(var + EPS)
    scale = (gamma * inv).reshape(Cout, 1).astype(jnp.float32)
    shift = (beta - mean * gamma * inv).reshape(Cout, 1).astype(jnp.float32)

    # Pass 2: normalize + ReLU (lane-dense).
    o_t = bn_relu_pallas(scale, shift, y_t, tm)

    # (C, Mp) -> slice padding -> NCHW.
    o = o_t[:, :M].reshape(Cout, N, Ho, Wo)
    return jnp.transpose(o, (1, 0, 2, 3))


def reference_forward(x, weight, bias, gamma, beta, stride=1, padding=1):
    """Pure-JAX reference (mirrors the intentional bf16 cast of matmul inputs)."""
    xq = x.astype(jnp.bfloat16).astype(jnp.float32)
    wq = weight.astype(jnp.bfloat16).astype(jnp.float32)
    f = jax.lax.conv_general_dilated(
        xq, wq, window_strides=(stride, stride),
        padding=((padding, padding), (padding, padding)),
        dimension_numbers=("NCHW", "OIHW", "NCHW"))
    f = f + bias.reshape(1, -1, 1, 1)
    mean = jnp.mean(f, axis=(0, 2, 3), keepdims=True)
    var = jnp.mean((f - mean) ** 2, axis=(0, 2, 3), keepdims=True)
    f = (f - mean) * jax.lax.rsqrt(var + EPS)
    f = f * gamma.reshape(1, -1, 1, 1) + beta.reshape(1, -1, 1, 1)
    return jnp.maximum(f, 0.0)


if __name__ == "__main__":
    # Module config: in_channels=4, out_channels=8, kernel_size=3, dim=2,
    # stride=1, padding=1, norm_type='batch_norm', acti_func=ReLU
    N, Cin, H, W = 2, 4, 16, 16
    Cout, kh, kw = 8, 3, 3

    key = jax.random.PRNGKey(0)
    kx, kw_, kb = jax.random.split(key, 3)
    x = jax.random.normal(kx, (N, Cin, H, W), dtype=jnp.float32)
    fan_in = Cin * kh * kw
    weight = jax.random.normal(kw_, (Cout, Cin, kh, kw), dtype=jnp.float32) / jnp.sqrt(fan_in)
    bias = jax.random.uniform(kb, (Cout,), dtype=jnp.float32, minval=-0.1, maxval=0.1)
    gamma = jnp.ones((Cout,), dtype=jnp.float32)   # nn.BatchNorm2d weight init
    beta = jnp.zeros((Cout,), dtype=jnp.float32)   # nn.BatchNorm2d bias init

    # block_m=128 exercises a 4-tile grid (M = N*Ho*Wo = 512), including the
    # cross-tile BatchNorm statistics combine.  Use >=512 for real sizes.
    out = convolution_layer_forward(x, weight, bias, gamma, beta,
                                    stride=1, padding=1, block_m=128)
    out = jax.block_until_ready(out)

    ref = reference_forward(x, weight, bias, gamma, beta, stride=1, padding=1)
    assert out.shape == (N, Cout, H, W)
    assert jnp.allclose(out, ref, atol=2e-2, rtol=2e-2), "mismatch vs reference"

    print("KERNEL_OK")
</pallas_src>

<mosaic_0001>
module attributes {stable_mosaic.version = 11 : i64} {
  func.func @conv_stats_kernel(%arg0: i32, %arg1: memref<8x40xbf16, #tpu.memory_space<vmem>>, %arg2: memref<40x128xbf16, #tpu.memory_space<vmem>>, %arg3: memref<8x128xf32, #tpu.memory_space<vmem>>, %arg4: memref<1x8x1xf32, #tpu.memory_space<vmem>>, %arg5: memref<1x8x1xf32, #tpu.memory_space<vmem>>) attributes {dimension_semantics = [#tpu.dimension_semantics<parallel>], iteration_bounds = array<i64: 4>, scalar_prefetch = 0 : i64, scratch_operands = 0 : i64, tpu.core_type = #tpu.core_type<tc>, window_params = [{pipeline_mode = #tpu.pipeline_mode<synchronous>, transform_indices = @transform_0, window_bounds = array<i64: 8, 40>}, {transform_indices = @transform_1, window_bounds = array<i64: 40, 128>}, {transform_indices = @transform_2, window_bounds = array<i64: 8, 128>}, {transform_indices = @transform_3, window_bounds = array<i64: 1, 8, 1>}, {transform_indices = @transform_4, window_bounds = array<i64: 1, 8, 1>}]} {
    %c0 = arith.constant 0 : index
    %c0_0 = arith.constant 0 : index
    %0 = vector.load %arg1[%c0, %c0_0] : memref<8x40xbf16, #tpu.memory_space<vmem>>, vector<8x40xbf16>
    %c0_1 = arith.constant 0 : index
    %c0_2 = arith.constant 0 : index
    %1 = vector.load %arg2[%c0_1, %c0_2] : memref<40x128xbf16, #tpu.memory_space<vmem>>, vector<40x128xbf16>
    %cst = arith.constant dense<0.000000e+00> : vector<8x128xf32>
    %2 = tpu.matmul %0, %1, %cst {dimension_numbers = #tpu.dot_dimension_numbers<[1], [0], [0], [1], [0, 0, 1, 1], [], []>} : vector<8x40xbf16>, vector<40x128xbf16>, vector<8x128xf32> -> vector<8x128xf32>
    %c0_3 = arith.constant 0 : index
    %c0_4 = arith.constant 0 : index
    %3 = vector.load %arg3[%c0_3, %c0_4] : memref<8x128xf32, #tpu.memory_space<vmem>>, vector<8x128xf32>
    tpu.vector_store %arg3[%c0_3, %c0_4], %2 {strides = array<i32>} : memref<8x128xf32, #tpu.memory_space<vmem>>, vector<8x128xf32>,
    %cst_5 = arith.constant dense<0.000000e+00> : vector<8xf32>
    %4 = vector.multi_reduction <add>, %2, %cst_5 [1] : vector<8x128xf32> to vector<8xf32>
    %5 = vector.shape_cast %4 : vector<8xf32> to vector<8x1xf32>
    %c0_6 = arith.constant 0 : index
    %c0_7 = arith.constant 0 : index
    %c0_8 = arith.constant 0 : index
    %6 = vector.load %arg4[%c0_6, %c0_7, %c0_8] : memref<1x8x1xf32, #tpu.memory_space<vmem>>, vector<1x8x1xf32>
    %7 = vector.shape_cast %6 : vector<1x8x1xf32> to vector<8x1xf32>
    %8 = vector.shape_cast %5 : vector<8x1xf32> to vector<1x8x1xf32>
    tpu.vector_store %arg4[%c0_6, %c0_7, %c0_8], %8 {strides = array<i32>} : memref<1x8x1xf32, #tpu.memory_space<vmem>>, vector<1x8x1xf32>,
    %9 = arith.mulf %2, %2 : vector<8x128xf32>
    %cst_9 = arith.constant dense<0.000000e+00> : vector<8xf32>
    %10 = vector.multi_reduction <add>, %9, %cst_9 [1] : vector<8x128xf32> to vector<8xf32>
    %11 = vector.shape_cast %10 : vector<8xf32> to vector<8x1xf32>
    %c0_10 = arith.constant 0 : index
    %c0_11 = arith.constant 0 : index
    %c0_12 = arith.constant 0 : index
    %12 = vector.load %arg5[%c0_10, %c0_11, %c0_12] : memref<1x8x1xf32, #tpu.memory_space<vmem>>, vector<1x8x1xf32>
    %13 = vector.shape_cast %12 : vector<1x8x1xf32> to vector<8x1xf32>
    %14 = vector.shape_cast %11 : vector<8x1xf32> to vector<1x8x1xf32>
    tpu.vector_store %arg5[%c0_10, %c0_11, %c0_12], %14 {strides = array<i32>} : memref<1x8x1xf32, #tpu.memory_space<vmem>>, vector<1x8x1xf32>,
    return
  }
  func.func @transform_0(%arg0: i32) -> (i32, i32) {
    %c0_i32 = arith.constant 0 : i32
    %c0_i32_0 = arith.constant 0 : i32
    %c0_i32_1 = arith.constant 0 : i32
    return %c0_i32, %c0_i32_0 : i32, i32
  }
  func.func @transform_1(%arg0: i32) -> (i32, i32) {
    %c0_i32 = arith.constant 0 : i32
    %c0_i32_0 = arith.constant 0 : i32
    return %c0_i32, %arg0 : i32, i32
  }
  func.func @transform_2(%arg0: i32) -> (i32, i32) {
    %c0_i32 = arith.constant 0 : i32
    %c0_i32_0 = arith.constant 0 : i32
    return %c0_i32, %arg0 : i32, i32
  }
  func.func @transform_3(%arg0: i32) -> (i32, i32, i32) {
    %c0_i32 = arith.constant 0 : i32
    %c0_i32_0 = arith.constant 0 : i32
    %c0_i32_1 = arith.constant 0 : i32
    return %arg0, %c0_i32, %c0_i32_0 : i32, i32, i32
  }
  func.func @transform_4(%arg0: i32) -> (i32, i32, i32) {
    %c0_i32 = arith.constant 0 : i32
    %c0_i32_0 = arith.constant 0 : i32
    %c0_i32_1 = arith.constant 0 : i32
    return %arg0, %c0_i32, %c0_i32_0 : i32, i32, i32
  }
}

module attributes {stable_mosaic.version = 11 : i64} {
  func.func @bn_relu_kernel(%arg0: i32, %arg1: memref<8x1xf32, #tpu.memory_space<vmem>>, %arg2: memref<8x1xf32, #tpu.memory_space<vmem>>, %arg3: memref<8x128xf32, #tpu.memory_space<vmem>>, %arg4: memref<8x128xf32, #tpu.memory_space<vmem>>) attributes {dimension_semantics = [#tpu.dimension_semantics<parallel>], iteration_bounds = array<i64: 4>, scalar_prefetch = 0 : i64, scratch_operands = 0 : i64, tpu.core_type = #tpu.core_type<tc>, window_params = [{pipeline_mode = #tpu.pipeline_mode<synchronous>, transform_indices = @transform_0, window_bounds = array<i64: 8, 1>}, {pipeline_mode = #tpu.pipeline_mode<synchronous>, transform_indices = @transform_1, window_bounds = array<i64: 8, 1>}, {transform_indices = @transform_2, window_bounds = array<i64: 8, 128>}, {transform_indices = @transform_3, window_bounds = array<i64: 8, 128>}]} {
    %c0 = arith.constant 0 : index
    %c0_0 = arith.constant 0 : index
    %0 = vector.load %arg3[%c0, %c0_0] : memref<8x128xf32, #tpu.memory_space<vmem>>, vector<8x128xf32>
    %c0_1 = arith.constant 0 : index
    %c0_2 = arith.constant 0 : index
    %1 = vector.load %arg1[%c0_1, %c0_2] : memref<8x1xf32, #tpu.memory_space<vmem>>, vector<8x1xf32>
    %2 = vector.broadcast %1 : vector<8x1xf32> to vector<8x128xf32>
    %3 = arith.mulf %0, %2 : vector<8x128xf32>
    %c0_3 = arith.constant 0 : index
    %c0_4 = arith.constant 0 : index
    %4 = vector.load %arg2[%c0_3, %c0_4] : memref<8x1xf32, #tpu.memory_space<vmem>>, vector<8x1xf32>
    %5 = vector.broadcast %4 : vector<8x1xf32> to vector<8x128xf32>
    %6 = arith.addf %3, %5 : vector<8x128xf32>
    %cst = arith.constant 0.000000e+00 : f32
    %7 = vector.broadcast %cst : f32 to vector<8x128xf32>
    %8 = arith.maximumf %6, %7 : vector<8x128xf32>
    %c0_5 = arith.constant 0 : index
    %c0_6 = arith.constant 0 : index
    %9 = vector.load %arg4[%c0_5, %c0_6] : memref<8x128xf32, #tpu.memory_space<vmem>>, vector<8x128xf32>
    tpu.vector_store %arg4[%c0_5, %c0_6], %8 {strides = array<i32>} : memref<8x128xf32, #tpu.memory_space<vmem>>, vector<8x128xf32>,
    return
  }
  func.func @transform_0(%arg0: i32) -> (i32, i32) {
    %c0_i32 = arith.constant 0 : i32
    %c0_i32_0 = arith.constant 0 : i32
    %c0_i32_1 = arith.constant 0 : i32
    return %c0_i32, %c0_i32_0 : i32, i32
  }
  func.func @transform_1(%arg0: i32) -> (i32, i32) {
    %c0_i32 = arith.constant 0 : i32
    %c0_i32_0 = arith.constant 0 : i32
    %c0_i32_1 = arith.constant 0 : i32
    return %c0_i32, %c0_i32_0 : i32, i32
  }
  func.func @transform_2(%arg0: i32) -> (i32, i32) {
    %c0_i32 = arith.constant 0 : i32
    %c0_i32_0 = arith.constant 0 : i32
    return %c0_i32, %arg0 : i32, i32
  }
  func.func @transform_3(%arg0: i32) -> (i32, i32) {
    %c0_i32 = arith.constant 0 : i32
    %c0_i32_0 = arith.constant 0 : i32
    return %c0_i32, %arg0 : i32, i32
  }
}

</mosaic_0001>

<llo_original>
// kernel: convolution_layer_forward.3
$region0: #{convolution_layer_forward.3}
  #allocation0 [shape = 'u32[]', space=smem, size = 0x4, offset = 0x4, fixed_abs, tag = 'smem constant byte address 0x4 - core index']
  #allocation1 [shape = 'u32[72,128]{1,0:T(1,128)}', space=vmem, size = 0x9000, scoped, tag = 'internal scratch']
  %s0 = inlined_call_operand.vmem [shape: f32[8,1], index: 0, kind: input, shape index: {}]
  %s1 = inlined_call_operand.vmem [shape: f32[8,1], index: 1, kind: input, shape index: {}]
  %s2 = inlined_call_operand.vmem [shape: f32[8,512], index: 2, kind: input, shape index: {}]
  %s3 = inlined_call_operand.vmem [shape: f32[8,512], index: 3, kind: output, shape index: {}]
  %s4 = sld [smem:[#allocation0]]
  $region45: #{convolution_layer_forward.3} parent=0
    _
  %s6 = ssub.s32 1, %s4
  %s7 = scalar_select 0, %s6, %s4
  loop: start=0, step=1, limit=6
  $region2: #{convolution_layer_forward.3} parent=0 // loop_pre_header
    _
  $region3: #{convolution_layer_forward.3} parent=0 // loop_header
    %s9 = sphi 0, %s13
    %p10 = scmp.ge.s32.totalorder %s9, 6
    %s17 = sphi 0, %s17
    %s19 = sphi 0, %s17
    %s20 = sphi 0, %s19
    %s34 = sphi 0, %s20
    %s38 = sphi 0, %s38
    %s40 = sphi 0, %s38
    %s41 = sphi 0, %s40
    %s55 = sphi 0, %s41
    %s61 = sphi 0, %s63
    %s64 = sphi 0, %s61
    %s65 = sphi 0, %s64
    %s81 = sphi 0, %s65
    %s87 = sphi 0, %s89
    %s90 = sphi 0, %s87
    %s91 = sphi 0, %s90
    %s107 = sphi 0, %s91
  $region4: #{convolution_layer_forward.3} parent=0 // loop_header_branch
    %12 = sbr.rel (%p10) target = $region8
  $region5: #{convolution_layer_forward.3} parent=0 // loop_body
    %s14 = ssub.s32 %s9, 1
    %s15 = ssub.s32 %s9, 2
    %s16 = sadd.s32 %s9, 1
    %s18 = sadd.s32 %s17, 1
    %p21 = scmp.eq.s32.totalorder %s9, 3
    %p22 = scmp.ne.s32.totalorder %s17, %s19
    %p23 = scmp.eq.s32.totalorder %s9, 0
    %p24 = por %p22, %p23
    %p25 = scmp.ne.s32.totalorder %s17, %s19
    %p26 = scmp.eq.s32.totalorder %s14, 3
    %p27 = por %p25, %p26
    %p28 = scmp.ne.s32.totalorder %s19, %s20
    %p29 = scmp.eq.s32.totalorder %s14, 0
    %p30 = por %p28, %p29
    %p31 = scmp.ne.s32.totalorder %s19, %s20
    %p32 = scmp.eq.s32.totalorder %s15, 3
    %p33 = por %p31, %p32
    %p35 = scmp.ne.s32.totalorder %s20, %s34
    %p36 = scmp.eq.s32.totalorder %s15, 0
    %p37 = por %p35, %p36
    %s39 = sadd.s32 %s38, 1
    %p42 = scmp.eq.s32.totalorder %s9, 3
    %p43 = scmp.ne.s32.totalorder %s38, %s40
    %p44 = scmp.eq.s32.totalorder %s9, 0
    %p45 = por %p43, %p44
    %p46 = scmp.ne.s32.totalorder %s38, %s40
    %p47 = scmp.eq.s32.totalorder %s14, 3
    %p48 = por %p46, %p47
    %p49 = scmp.ne.s32.totalorder %s40, %s41
    %p50 = scmp.eq.s32.totalorder %s14, 0
    %p51 = por %p49, %p50
    %p52 = scmp.ne.s32.totalorder %s40, %s41
    %p53 = scmp.eq.s32.totalorder %s15, 3
    %p54 = por %p52, %p53
    %p56 = scmp.ne.s32.totalorder %s41, %s55
    %p57 = scmp.eq.s32.totalorder %s15, 0
    %p58 = por %p56, %p57
    %s59 = ssub.s32 %s9, %s16
    %p60 = scmp.eq.s32.totalorder %s59, 0
    %s62 = sadd.s32 %s61, 1
    %s63 = scalar_select %p60, %s61, %s62
    %p66 = pneg %p60
    %p67 = scmp.eq.s32.totalorder %s9, 3
    %p68 = por %p66, %p67
    %p69 = scmp.ne.s32.totalorder %s61, %s64
    %p70 = scmp.eq.s32.totalorder %s9, 0
    %p71 = por %p69, %p70
    %p72 = scmp.ne.s32.totalorder %s61, %s64
    %p73 = scmp.eq.s32.totalorder %s14, 3
    %p74 = por %p72, %p73
    %p75 = scmp.ne.s32.totalorder %s64, %s65
    %p76 = scmp.eq.s32.totalorder %s14, 0
    %p77 = por %p75, %p76
    %p78 = scmp.ne.s32.totalorder %s64, %s65
    %p79 = scmp.eq.s32.totalorder %s15, 3
    %p80 = por %p78, %p79
    %p82 = scmp.ne.s32.totalorder %s65, %s81
    %p83 = scmp.eq.s32.totalorder %s15, 0
    %p84 = por %p82, %p83
    %s85 = ssub.s32 %s9, %s16
    %p86 = scmp.eq.s32.totalorder %s85, 0
    %s88 = sadd.s32 %s87, 1
    %s89 = scalar_select %p86, %s87, %s88
    %p92 = pneg %p86
    %p93 = scmp.eq.s32.totalorder %s9, 3
    %p94 = por %p92, %p93
    %p95 = scmp.ne.s32.totalorder %s87, %s90
    %p96 = scmp.eq.s32.totalorder %s9, 0
    %p97 = por %p95, %p96
    %p98 = scmp.ne.s32.totalorder %s87, %s90
    %p99 = scmp.eq.s32.totalorder %s14, 3
    %p100 = por %p98, %p99
    %p101 = scmp.ne.s32.totalorder %s90, %s91
    %p102 = scmp.eq.s32.totalorder %s14, 0
    %p103 = por %p101, %p102
    %p104 = scmp.ne.s32.totalorder %s90, %s91
    %p105 = scmp.eq.s32.totalorder %s15, 3
    %p106 = por %p104, %p105
    %p108 = scmp.ne.s32.totalorder %s91, %s107
    %p109 = scmp.eq.s32.totalorder %s15, 0
    %p110 = por %p108, %p109
    %p111 = scmp.le.s32.totalorder 1, %s9
    %p112 = scmp.lt.s32.totalorder %s9, 5
    %p113 = pnand %p111, %p112
    %p114 = pneg %p113
    // Predicated region
    $region9: #{convolution_layer_forward.3} parent=5 // pred_check
      _
    $region10: #{convolution_layer_forward.3} parent=5 // pred_check_branch
      %116 = sbr.rel (%p113) target = $region12
    $region11: #{convolution_layer_forward.3} parent=5 // pred_region
      %s117 = ssub.s32 %s9, 1
      // Predicated region
      $region13: #{convolution_layer_forward.3} parent=11 // pred_check
        %p118 = pneg %p30
      $region14: #{convolution_layer_forward.3} parent=11 // pred_check_branch
        %120 = sbr.rel (%p118) target = $region16
      $region15: #{convolution_layer_forward.3} parent=11 // pred_region
        _
      $region16: #{convolution_layer_forward.3} parent=11 // pred_fallthru
        _
      // Predicated region
      $region17: #{convolution_layer_forward.3} parent=11 // pred_check
        %p121 = pneg %p51
      $region18: #{convolution_layer_forward.3} parent=11 // pred_check_branch
        %123 = sbr.rel (%p121) target = $region20
      $region19: #{convolution_layer_forward.3} parent=11 // pred_region
        _
      $region20: #{convolution_layer_forward.3} parent=11 // pred_fallthru
        _
    $region12: #{convolution_layer_forward.3} parent=5 // pred_fallthru
      _
    %p124 = scmp.lt.s32.totalorder %s9, 4
    // Predicated region
    $region21: #{convolution_layer_forward.3} parent=5 // pred_check
      %p125 = pneg %p124
    $region22: #{convolution_layer_forward.3} parent=5 // pred_check_branch
      %127 = sbr.rel (%p125) target = $region24
    $region23: #{convolution_layer_forward.3} parent=5 // pred_region
      // Predicated region
      $region25: #{convolution_layer_forward.3} parent=23 // pred_check
        %p128 = pneg %p71
      $region26: #{convolution_layer_forward.3} parent=23 // pred_check_branch
        %130 = sbr.rel (%p128) target = $region28
      $region27: #{convolution_layer_forward.3} parent=23 // pred_region
        %p131 = scmp.lt.s32.totalorder %s9, 3
        %s132 = scalar_select %p131, %s9, 3
        %s133 = smul.addr %s132, 8
        %s134 = scalar_lea.vmem %s2, %s133
      $region28: #{convolution_layer_forward.3} parent=23 // pred_fallthru
        _
    $region24: #{convolution_layer_forward.3} parent=5 // pred_fallthru
      _
    %p135 = scmp.le.s32.totalorder 1, %s9
    %p136 = scmp.lt.s32.totalorder %s9, 5
    %p137 = pnand %p135, %p136
    %p138 = pneg %p137
    // Predicated region
    $region29: #{convolution_layer_forward.3} parent=5 // pred_check
      _
    $region30: #{convolution_layer_forward.3} parent=5 // pred_check_branch
      %140 = sbr.rel (%p137) target = $region32
    $region31: #{convolution_layer_forward.3} parent=5 // pred_region
      %s141 = ssub.s32 %s9, 1
      %p142 = pneg %p30
      %p143 = pneg %p27
      %p144 = pneg %p51
      %p145 = pneg %p48
      %p146 = scmp.lt.s32.totalorder %s14, 3
      %s147 = scalar_select %p146, %s14, 3
      %s148 = smul.addr %s147, 8
      %s149 = scalar_lea.vmem %s2, %s148
      %p150 = pneg %p77
      %p151 = pneg %p74
      %p152 = pneg %p103
      %p153 = pneg %p100
      %p154 = scmp.lt.s32.totalorder %s14, 3
      %s155 = scalar_select %p154, %s14, 3
      %s156 = smul.addr %s155, 8
      %s157 = scalar_lea.vmem %s3, %s156
      %p158 = scmp.lt.s32.totalorder %s14, 3
      %s159 = scalar_select %p158, %s14, 3
      %s160 = smul.addr %s159, 8
      %s161 = scalar_lea.vmem %s2, %s160
      %p162 = scmp.lt.s32.totalorder %s14, 3
      %s163 = scalar_select %p162, %s14, 3
      %s164 = smul.addr %s163, 8
      %s165 = scalar_lea.vmem %s3, %s164
      %v166 = vld [vmem:[%s161] sm:$0xff]
      %v167 = vld [vmem:[%s0] sm:$0xff]
      %169 = vset.pattern.permute.xlu0 0
      %170 = vperm.xlu0 %169, %v167
      %v171 = vpop.permute.xlu0 %170
      %v173 = vmul.f32 %v166, %v171
      %v174 = vld [vmem:[%s1] sm:$0xff]
      %176 = vset.pattern.permute.xlu0 0
      %177 = vperm.xlu0 %176, %v174
      %v178 = vpop.permute.xlu0 %177
      %v180 = vadd.f32 %v173, %v178
      %v181 = vmax.f32 %v180, 0.0
      %182 = vst [vmem:[%s165] sm:$0xff] %v181
      %p183 = scmp.lt.s32.totalorder %s14, 3
      %s184 = scalar_select %p183, %s14, 3
      %s185 = smul.addr %s184, 8
      %s186 = scalar_lea.vmem %s3, %s185
      // Predicated region
      $region33: #{convolution_layer_forward.3} parent=31 // pred_check
        %p187 = pneg %p100
      $region34: #{convolution_layer_forward.3} parent=31 // pred_check_branch
        %189 = sbr.rel (%p187) target = $region36
      $region35: #{convolution_layer_forward.3} parent=31 // pred_region
        _
      $region36: #{convolution_layer_forward.3} parent=31 // pred_fallthru
        _
    $region32: #{convolution_layer_forward.3} parent=5 // pred_fallthru
      _
    %p190 = scmp.le.s32.totalorder 2, %s9
    // Predicated region
    $region37: #{convolution_layer_forward.3} parent=5 // pred_check
      %p191 = pneg %p190
    $region38: #{convolution_layer_forward.3} parent=5 // pred_check_branch
      %193 = sbr.rel (%p191) target = $region40
    $region39: #{convolution_layer_forward.3} parent=5 // pred_region
      %s194 = ssub.s32 %s9, 2
      // Predicated region
      $region41: #{convolution_layer_forward.3} parent=39 // pred_check
        %p195 = pneg %p106
      $region42: #{convolution_layer_forward.3} parent=39 // pred_check_branch
        %197 = sbr.rel (%p195) target = $region44
      $region43: #{convolution_layer_forward.3} parent=39 // pred_region
        %p198 = scmp.lt.s32.totalorder %s15, 3
        %s199 = scalar_select %p198, %s15, 3
        %s200 = smul.addr %s199, 8
        %s201 = scalar_lea.vmem %s3, %s200
      $region44: #{convolution_layer_forward.3} parent=39 // pred_fallthru
        _
    $region40: #{convolution_layer_forward.3} parent=5 // pred_fallthru
      _
  $region6: #{convolution_layer_forward.3} parent=0 // loop_footer
    %s13 = sadd.s32 1, %s9
  $region7: #{convolution_layer_forward.3} parent=0 // loop_footer_branch
    %8 = sbr.rel target = $region3
  $region8: #{convolution_layer_forward.3} parent=0 // loop_exit
    _

// kernel: convolution_layer_forward.2
$region0: #{convolution_layer_forward.2}
  #allocation0 [shape = 'u32[]', space=smem, size = 0x4, offset = 0x4, fixed_abs, tag = 'smem constant byte address 0x4 - core index']
  #allocation1 [shape = 'u32[72,128]{1,0:T(1,128)}', space=vmem, size = 0x9000, scoped, tag = 'internal scratch']
  %s0 = inlined_call_operand.vmem [shape: bf16[8,40], index: 0, kind: input, shape index: {}]
  %s1 = inlined_call_operand.vmem [shape: bf16[40,512], index: 1, kind: input, shape index: {}]
  %s2 = inlined_call_operand.vmem [shape: f32[8,512], index: 2, kind: output, shape index: {0}]
  %s3 = inlined_call_operand.vmem [shape: f32[4,8,1], index: 3, kind: output, shape index: {1}]
  %s4 = inlined_call_operand.vmem [shape: f32[4,8,1], index: 4, kind: output, shape index: {2}]
  %5 = xla_tuple %s2, %s3, %s4
  %s6 = sld [smem:[#allocation0]]
  $region98: #{convolution_layer_forward.2} parent=0
    _
  %s8 = ssub.s32 1, %s6
  %s9 = scalar_select 0, %s8, %s6
  $region1: #{convolution_layer_forward.2} parent=0
    #allocation2 [shape = 'u8[20480]{0}', space=vmem, size = 0x5000, scoped, tag = 'input window, operand 1']
    loop: start=0, step=1, limit=6
    $region2: #{convolution_layer_forward.2} parent=1 // loop_pre_header
      _
    $region3: #{convolution_layer_forward.2} parent=1 // loop_header
      %s11 = sphi 0, %s15
      %p12 = scmp.ge.s32.totalorder %s11, 6
      %s19 = sphi 0, %s19
      %s21 = sphi 0, %s19
      %s22 = sphi 0, %s21
      %s36 = sphi 0, %s22
      %s42 = sphi 0, %s44
      %s45 = sphi 0, %s42
      %s46 = sphi 0, %s45
      %s62 = sphi 0, %s46
      %s68 = sphi 0, %s70
      %s71 = sphi 0, %s68
      %s72 = sphi 0, %s71
      %s88 = sphi 0, %s72
      %s94 = sphi 0, %s96
      %s97 = sphi 0, %s94
      %s98 = sphi 0, %s97
      %s114 = sphi 0, %s98
      %s120 = sphi 0, %s122
      %s123 = sphi 0, %s120
      %s124 = sphi 0, %s123
      %s140 = sphi 0, %s124
    $region4: #{convolution_layer_forward.2} parent=1 // loop_header_branch
      %14 = sbr.rel (%p12) target = $region8
    $region5: #{convolution_layer_forward.2} parent=1 // loop_body
      %s16 = ssub.s32 %s11, 1
      %s17 = ssub.s32 %s11, 2
      %s18 = sadd.s32 %s11, 1
      %s20 = sadd.s32 %s19, 1
      %p23 = scmp.eq.s32.totalorder %s11, 3
      %p24 = scmp.ne.s32.totalorder %s19, %s21
      %p25 = scmp.eq.s32.totalorder %s11, 0
      %p26 = por %p24, %p25
      %p27 = scmp.ne.s32.totalorder %s19, %s21
      %p28 = scmp.eq.s32.totalorder %s16, 3
      %p29 = por %p27, %p28
      %p30 = scmp.ne.s32.totalorder %s21, %s22
      %p31 = scmp.eq.s32.totalorder %s16, 0
      %p32 = por %p30, %p31
      %p33 = scmp.ne.s32.totalorder %s21, %s22
      %p34 = scmp.eq.s32.totalorder %s17, 3
      %p35 = por %p33, %p34
      %p37 = scmp.ne.s32.totalorder %s22, %s36
      %p38 = scmp.eq.s32.totalorder %s17, 0
      %p39 = por %p37, %p38
      %s40 = ssub.s32 %s11, %s18
      %p41 = scmp.eq.s32.totalorder %s40, 0
      %s43 = sadd.s32 %s42, 1
      %s44 = scalar_select %p41, %s42, %s43
      %p47 = pneg %p41
      %p48 = scmp.eq.s32.totalorder %s11, 3
      %p49 = por %p47, %p48
      %p50 = scmp.ne.s32.totalorder %s42, %s45
      %p51 = scmp.eq.s32.totalorder %s11, 0
      %p52 = por %p50, %p51
      %p53 = scmp.ne.s32.totalorder %s42, %s45
      %p54 = scmp.eq.s32.totalorder %s16, 3
      %p55 = por %p53, %p54
      %p56 = scmp.ne.s32.totalorder %s45, %s46
      %p57 = scmp.eq.s32.totalorder %s16, 0
      %p58 = por %p56, %p57
      %p59 = scmp.ne.s32.totalorder %s45, %s46
      %p60 = scmp.eq.s32.totalorder %s17, 3
      %p61 = por %p59, %p60
      %p63 = scmp.ne.s32.totalorder %s46, %s62
      %p64 = scmp.eq.s32.totalorder %s17, 0
      %p65 = por %p63, %p64
      %s66 = ssub.s32 %s11, %s18
      %p67 = scmp.eq.s32.totalorder %s66, 0
      %s69 = sadd.s32 %s68, 1
      %s70 = scalar_select %p67, %s68, %s69
      %p73 = pneg %p67
      %p74 = scmp.eq.s32.totalorder %s11, 3
      %p75 = por %p73, %p74
      %p76 = scmp.ne.s32.totalorder %s68, %s71
      %p77 = scmp.eq.s32.totalorder %s11, 0
      %p78 = por %p76, %p77
      %p79 = scmp.ne.s32.totalorder %s68, %s71
      %p80 = scmp.eq.s32.totalorder %s16, 3
      %p81 = por %p79, %p80
      %p82 = scmp.ne.s32.totalorder %s71, %s72
      %p83 = scmp.eq.s32.totalorder %s16, 0
      %p84 = por %p82, %p83
      %p85 = scmp.ne.s32.totalorder %s71, %s72
      %p86 = scmp.eq.s32.totalorder %s17, 3
      %p87 = por %p85, %p86
      %p89 = scmp.ne.s32.totalorder %s72, %s88
      %p90 = scmp.eq.s32.totalorder %s17, 0
      %p91 = por %p89, %p90
      %s92 = ssub.s32 %s11, %s18
      %p93 = scmp.eq.s32.totalorder %s92, 0
      %s95 = sadd.s32 %s94, 1
      %s96 = scalar_select %p93, %s94, %s95
      %p99 = pneg %p93
      %p100 = scmp.eq.s32.totalorder %s11, 3
      %p101 = por %p99, %p100
      %p102 = scmp.ne.s32.totalorder %s94, %s97
      %p103 = scmp.eq.s32.totalorder %s11, 0
      %p104 = por %p102, %p103
      %p105 = scmp.ne.s32.totalorder %s94, %s97
      %p106 = scmp.eq.s32.totalorder %s16, 3
      %p107 = por %p105, %p106
      %p108 = scmp.ne.s32.totalorder %s97, %s98
      %p109 = scmp.eq.s32.totalorder %s16, 0
      %p110 = por %p108, %p109
      %p111 = scmp.ne.s32.totalorder %s97, %s98
      %p112 = scmp.eq.s32.totalorder %s17, 3
      %p113 = por %p111, %p112
      %p115 = scmp.ne.s32.totalorder %s98, %s114
      %p116 = scmp.eq.s32.totalorder %s17, 0
      %p117 = por %p115, %p116
      %s118 = ssub.s32 %s11, %s18
      %p119 = scmp.eq.s32.totalorder %s118, 0
      %s121 = sadd.s32 %s120, 1
      %s122 = scalar_select %p119, %s120, %s121
      %p125 = pneg %p119
      %p126 = scmp.eq.s32.totalorder %s11, 3
      %p127 = por %p125, %p126
      %p128 = scmp.ne.s32.totalorder %s120, %s123
      %p129 = scmp.eq.s32.totalorder %s11, 0
      %p130 = por %p128, %p129
      %p131 = scmp.ne.s32.totalorder %s120, %s123
      %p132 = scmp.eq.s32.totalorder %s16, 3
      %p133 = por %p131, %p132
      %p134 = scmp.ne.s32.totalorder %s123, %s124
      %p135 = scmp.eq.s32.totalorder %s16, 0
      %p136 = por %p134, %p135
      %p137 = scmp.ne.s32.totalorder %s123, %s124
      %p138 = scmp.eq.s32.totalorder %s17, 3
      %p139 = por %p137, %p138
      %p141 = scmp.ne.s32.totalorder %s124, %s140
      %p142 = scmp.eq.s32.totalorder %s17, 0
      %p143 = por %p141, %p142
      %p144 = scmp.le.s32.totalorder 1, %s11
      %p145 = scmp.lt.s32.totalorder %s11, 5
      %p146 = pnand %p144, %p145
      %p147 = pneg %p146
      // Predicated region
      $region9: #{convolution_layer_forward.2} parent=5 // pred_check
        _
      $region10: #{convolution_layer_forward.2} parent=5 // pred_check_branch
        %149 = sbr.rel (%p146) target = $region12
      $region11: #{convolution_layer_forward.2} parent=5 // pred_region
        %s150 = ssub.s32 %s11, 1
        // Predicated region
        $region13: #{convolution_layer_forward.2} parent=11 // pred_check
          %p151 = pneg %p32
        $region14: #{convolution_layer_forward.2} parent=11 // pred_check_branch
          %153 = sbr.rel (%p151) target = $region16
        $region15: #{convolution_layer_forward.2} parent=11 // pred_region
          _
        $region16: #{convolution_layer_forward.2} parent=11 // pred_fallthru
          _
      $region12: #{convolution_layer_forward.2} parent=5 // pred_fallthru
        _
      %p154 = scmp.lt.s32.totalorder %s11, 4
      // Predicated region
      $region17: #{convolution_layer_forward.2} parent=5 // pred_check
        %p155 = pneg %p154
      $region18: #{convolution_layer_forward.2} parent=5 // pred_check_branch
        %157 = sbr.rel (%p155) target = $region20
      $region19: #{convolution_layer_forward.2} parent=5 // pred_region
        // Predicated region
        $region21: #{convolution_layer_forward.2} parent=19 // pred_check
          %p158 = pneg %p52
        $region22: #{convolution_layer_forward.2} parent=19 // pred_check_branch
          %160 = sbr.rel (%p158) target = $region24
        $region23: #{convolution_layer_forward.2} parent=19 // pred_region
          %s161 = sand.u32 %s42, 1
          %s162 = sand.u32 %s42, 1
          %s163 = smul.addr %s162, 20
          %s164 = scalar_lea.vmem [#allocation2], %s163
          %s165 = smul.addr %s11, 4
          %s166 = scalar_lea.vmem %s1, %s165
          // Predicated region
          $region25: #{convolution_layer_forward.2} parent=23 // pred_check
            _
          $region26: #{convolution_layer_forward.2} parent=23 // pred_check_branch
            %168 = sbr.rel (0) target = $region28
          $region27: #{convolution_layer_forward.2} parent=23 // pred_region
            // Predicated region
            $region29: #{convolution_layer_forward.2} parent=27 // pred_check
              _
            $region30: #{convolution_layer_forward.2} parent=27 // pred_check_branch
              %170 = sbr.rel target = $region32
            $region31: #{convolution_layer_forward.2} parent=27 // pred_region
              // Predicated region
              $region44: #{convolution_layer_forward.2} parent=31 // pred_check
                _
              $region45: #{convolution_layer_forward.2} parent=31 // pred_check_branch
                %194 = sbr.rel (0) target = $region47
              $region46: #{convolution_layer_forward.2} parent=31 // pred_region
                loop: start=0, step=1, limit=1
                $region48: #{convolution_layer_forward.2} parent=46 // loop_pre_header
                  _
                $region49: #{convolution_layer_forward.2} parent=46 // loop_header
                  %s196 = sphi 0, %s200
                  %p197 = scmp.ge.s32.totalorder %s196, 1
                  %s201 = sphi %s166, %s166
                  %s202 = sphi %s164, %s164
                $region50: #{convolution_layer_forward.2} parent=46 // loop_header_branch
                  %199 = sbr.rel (%p197) target = $region54
                $region51: #{convolution_layer_forward.2} parent=46 // loop_body
                  _
                $region52: #{convolution_layer_forward.2} parent=46 // loop_footer
                  %s200 = sadd.s32 1, %s196
                $region53: #{convolution_layer_forward.2} parent=46 // loop_footer_branch
                  %195 = sbr.rel target = $region49
                $region54: #{convolution_layer_forward.2} parent=46 // loop_exit
                  _
                %s204 = ssub.s32 16, 1
                loop: start=0, step=1, limit=1
                $region55: #{convolution_layer_forward.2} parent=46 // loop_pre_header
                  _
                $region56: #{convolution_layer_forward.2} parent=46 // loop_header
                  %s206 = sphi 0, %s210
                  %p207 = scmp.ge.s32.totalorder %s206, 1
                  %s211 = sphi %s166, %s166
                  %s212 = sphi %s164, %s164
                $region57: #{convolution_layer_forward.2} parent=46 // loop_header_branch
                  %209 = sbr.rel (%p207) target = $region61
                $region58: #{convolution_layer_forward.2} parent=46 // loop_body
                  %v213 = vld [vmem:[%s211] sm:%s204]
                  %214 = vst [vmem:[%s212] sm:%s204] %v213
                  %v215 = vld [vmem:[%s211 + $0x10] sm:%s204]
                  %216 = vst [vmem:[%s212 + $0x4] sm:%s204] %v215
                  %v217 = vld [vmem:[%s211 + $0x20] sm:%s204]
                  %218 = vst [vmem:[%s212 + $0x8] sm:%s204] %v217
                  %v219 = vld [vmem:[%s211 + $0x30] sm:%s204]
                  %220 = vst [vmem:[%s212 + $0xc] sm:%s204] %v219
                  %v221 = vld [vmem:[%s211 + $0x40] sm:%s204]
                  %222 = vst [vmem:[%s212 + $0x10] sm:%s204] %v221
                $region59: #{convolution_layer_forward.2} parent=46 // loop_footer
                  %s210 = sadd.s32 1, %s206
                $region60: #{convolution_layer_forward.2} parent=46 // loop_footer_branch
                  %205 = sbr.rel target = $region56
                $region61: #{convolution_layer_forward.2} parent=46 // loop_exit
                  _
              $region47: #{convolution_layer_forward.2} parent=31 // pred_fallthru
                _
            $region32: #{convolution_layer_forward.2} parent=27 // pred_fallthru
              _
            // Predicated region
            $region33: #{convolution_layer_forward.2} parent=27 // pred_check
              _
            $region34: #{convolution_layer_forward.2} parent=27 // pred_check_branch
              %172 = sbr.rel (0) target = $region36
            $region35: #{convolution_layer_forward.2} parent=27 // pred_region
              %s174 = ssub.s32 16, 1
              loop: start=0, step=1, limit=1
              $region37: #{convolution_layer_forward.2} parent=35 // loop_pre_header
                _
              $region38: #{convolution_layer_forward.2} parent=35 // loop_header
                %s176 = sphi 0, %s180
                %p177 = scmp.ge.s32.totalorder %s176, 1
                %s181 = sphi %s166, %s166
                %s182 = sphi %s164, %s164
              $region39: #{convolution_layer_forward.2} parent=35 // loop_header_branch
                %179 = sbr.rel (%p177) target = $region43
              $region40: #{convolution_layer_forward.2} parent=35 // loop_body
                %v183 = vld [vmem:[%s181] sm:%s174]
                %184 = vst [vmem:[%s182] sm:%s174] %v183
                %v185 = vld [vmem:[%s181 + $0x10] sm:%s174]
                %186 = vst [vmem:[%s182 + $0x4] sm:%s174] %v185
                %v187 = vld [vmem:[%s181 + $0x20] sm:%s174]
                %188 = vst [vmem:[%s182 + $0x8] sm:%s174] %v187
                %v189 = vld [vmem:[%s181 + $0x30] sm:%s174]
                %190 = vst [vmem:[%s182 + $0xc] sm:%s174] %v189
                %v191 = vld [vmem:[%s181 + $0x40] sm:%s174]
                %192 = vst [vmem:[%s182 + $0x10] sm:%s174] %v191
              $region41: #{convolution_layer_forward.2} parent=35 // loop_footer
                %s180 = sadd.s32 1, %s176
              $region42: #{convolution_layer_forward.2} parent=35 // loop_footer_branch
                %175 = sbr.rel target = $region38
              $region43: #{convolution_layer_forward.2} parent=35 // loop_exit
                _
            $region36: #{convolution_layer_forward.2} parent=27 // pred_fallthru
              _
          $region28: #{convolution_layer_forward.2} parent=23 // pred_fallthru
            _
          %223 = vnop
        $region24: #{convolution_layer_forward.2} parent=19 // pred_fallthru
          _
      $region20: #{convolution_layer_forward.2} parent=5 // pred_fallthru
        _
      %p224 = scmp.le.s32.totalorder 1, %s11
      %p225 = scmp.lt.s32.totalorder %s11, 5
      %p226 = pnand %p224, %p225
      %p227 = pneg %p226
      // Predicated region
      $region62: #{convolution_layer_forward.2} parent=5 // pred_check
        _
      $region63: #{convolution_layer_forward.2} parent=5 // pred_check_branch
        %229 = sbr.rel (%p226) target = $region65
      $region64: #{convolution_layer_forward.2} parent=5 // pred_region
        %s230 = ssub.s32 %s11, 1
        %s231 = sand.u32 %s45, 1
        %s232 = sand.u32 %s45, 1
        %s233 = smul.addr %s232, 20
        %s234 = scalar_lea.vmem [#allocation2], %s233
        // Predicated region
        $region66: #{convolution_layer_forward.2} parent=64 // pred_check
          %p235 = pneg %p58
        $region67: #{convolution_layer_forward.2} parent=64 // pred_check_branch
          %237 = sbr.rel (%p235) target = $region69
        $region68: #{convolution_layer_forward.2} parent=64 // pred_region
          _
        $region69: #{convolution_layer_forward.2} parent=64 // pred_fallthru
          _
        %p238 = pneg %p32
        %p239 = pneg %p29
        %s240 = sand.u32 %s45, 1
        %s241 = sand.u32 %s45, 1
        %s242 = smul.addr %s241, 20
        %s243 = scalar_lea.vmem [#allocation2], %s242
        %p244 = pneg %p58
        %p245 = pneg %p55
        %p246 = pneg %p84
        %p247 = pneg %p81
        %p248 = scmp.lt.s32.totalorder %s16, 3
        %s249 = scalar_select %p248, %s16, 3
        %s250 = smul.addr %s249, 8
        %s251 = scalar_lea.vmem %s2, %s250
        %p252 = pneg %p110
        %p253 = pneg %p107
        %p254 = scmp.lt.s32.totalorder %s16, 3
        %s255 = scalar_select %p254, %s16, 3
        %s256 = smul.addr %s255, 8
        %s257 = scalar_lea.vmem %s3, %s256
        %p258 = pneg %p136
        %p259 = pneg %p133
        %p260 = scmp.lt.s32.totalorder %s16, 3
        %s261 = scalar_select %p260, %s16, 3
        %s262 = smul.addr %s261, 8
        %s263 = scalar_lea.vmem %s4, %s262
        %p264 = scmp.lt.s32.totalorder %s16, 3
        %s265 = scalar_select %p264, %s16, 3
        %s266 = smul.addr %s265, 8
        %s267 = scalar_lea.vmem %s2, %s266
        %p268 = scmp.lt.s32.totalorder %s16, 3
        %s269 = scalar_select %p268, %s16, 3
        %s270 = smul.addr %s269, 8
        %s271 = scalar_lea.vmem %s3, %s270
        %p272 = scmp.lt.s32.totalorder %s16, 3
        %s273 = scalar_select %p272, %s16, 3
        %s274 = smul.addr %s273, 8
        %s275 = scalar_lea.vmem %s4, %s274
        %v277 = vld [vmem:[%s0] sm:$0xf]
        %v278 = vld [vmem:[%s234] sm:$0xf]
        %v279 = vld [vmem:[%s234 + $0x4] sm:$0xf]
        %v280 = vld [vmem:[%s234 + $0x8] sm:$0xf]
        %v281 = vld [vmem:[%s234 + $0xc] sm:$0xf]
        %v282 = vld [vmem:[%s234 + $0x10] sm:$0xf]
        %v288 = vunpack.c.l.b16 %v278
        %v289 = vunpack.c.l.b16 %v279
        %v290 = vunpack.c.l.b16 %v280
        %v291 = vunpack.c.l.b16 %v281
        %v292 = vunpack.c.l.b16 %v282
        %v293 = vpack.c.b16 %v289, %v288
        %v294 = vpack.c.b16 %v291, %v290
        %v295 = vpack.c.b16 %v292, %v292
        %vm298 = vcmask 326656
        %v300 = vsel %vm298, %v277, 0
        %vm302 = vcmask 1043456
        %v304 = vsel %vm302, %v295, 0
        %306 = vmatpush.bf16.msra.mxu0 0
        %307 = vmatpush.bf16.msra.mxu0 0
        %308 = vmatpush.bf16.msra.mxu0 0
        %309 = vmatpush.bf16.msra.mxu0 0
        %310 = vmatpush.bf16.msra.mxu0 0
        %311 = vmatpush.bf16.msra.mxu0 %v304
        %312 = vmatpush.bf16.msra.mxu0 %v294
        %313 = vmatpush.bf16.msra.mxu0 %v293
        %314 = vmatmul.bf16.gmra.mxu0 %v300
        %v315 = vpop.f32.mrf.mxu0
        %v316 = vadd.f32 0.0, %v315
        %v317 = vpop.f32.mrf.mxu0
        %318 = vdwg.mxu0
        %319 = vst [vmem:[%s267] sm:$0xff] %v316
        %320 = vadd.xlane.f32.xlu0 %v316
        %v321 = vpop.xlane.xlu0 %320
        %vm322 = vcmask 7168
        %323 = vst.msk [vmem:[%s271] sm:$0xff] %vm322, %v321
        %v324 = vmul.f32 %v316, %v316
        %325 = vadd.xlane.f32.xlu0 %v324
        %v326 = vpop.xlane.xlu0 %325
        %327 = vst.msk [vmem:[%s275] sm:$0xff] %vm322, %v326
        %p328 = scmp.lt.s32.totalorder %s16, 3
        %s329 = scalar_select %p328, %s16, 3
        %s330 = smul.addr %s329, 8
        %s331 = scalar_lea.vmem %s2, %s330
        %p332 = scmp.lt.s32.totalorder %s16, 3
        %s333 = scalar_select %p332, %s16, 3
        %s334 = smul.addr %s333, 8
        %s335 = scalar_lea.vmem %s3, %s334
        %p336 = scmp.lt.s32.totalorder %s16, 3
        %s337 = scalar_select %p336, %s16, 3
        %s338 = smul.addr %s337, 8
        %s339 = scalar_lea.vmem %s4, %s338
        // Predicated region
        $region70: #{convolution_layer_forward.2} parent=64 // pred_check
          %p340 = pneg %p81
        $region71: #{convolution_layer_forward.2} parent=64 // pred_check_branch
          %342 = sbr.rel (%p340) target = $region73
        $region72: #{convolution_layer_forward.2} parent=64 // pred_region
          _
        $region73: #{convolution_layer_forward.2} parent=64 // pred_fallthru
          _
        // Predicated region
        $region74: #{convolution_layer_forward.2} parent=64 // pred_check
          %p343 = pneg %p107
        $region75: #{convolution_layer_forward.2} parent=64 // pred_check_branch
          %345 = sbr.rel (%p343) target = $region77
        $region76: #{convolution_layer_forward.2} parent=64 // pred_region
          _
        $region77: #{convolution_layer_forward.2} parent=64 // pred_fallthru
          _
        // Predicated region
        $region78: #{convolution_layer_forward.2} parent=64 // pred_check
          %p346 = pneg %p133
        $region79: #{convolution_layer_forward.2} parent=64 // pred_check_branch
          %348 = sbr.rel (%p346) target = $region81
        $region80: #{convolution_layer_forward.2} parent=64 // pred_region
          _
        $region81: #{convolution_layer_forward.2} parent=64 // pred_fallthru
          _
      $region65: #{convolution_layer_forward.2} parent=5 // pred_fallthru
        _
      %p349 = scmp.le.s32.totalorder 2, %s11
      // Predicated region
      $region82: #{convolution_layer_forward.2} parent=5 // pred_check
        %p350 = pneg %p349
      $region83: #{convolution_layer_forward.2} parent=5 // pred_check_branch
        %352 = sbr.rel (%p350) target = $region85
      $region84: #{convolution_layer_forward.2} parent=5 // pred_region
        %s353 = ssub.s32 %s11, 2
        // Predicated region
        $region86: #{convolution_layer_forward.2} parent=84 // pred_check
          %p354 = pneg %p87
        $region87: #{convolution_layer_forward.2} parent=84 // pred_check_branch
          %356 = sbr.rel (%p354) target = $region89
        $region88: #{convolution_layer_forward.2} parent=84 // pred_region
          %p357 = scmp.lt.s32.totalorder %s17, 3
          %s358 = scalar_select %p357, %s17, 3
          %s359 = smul.addr %s358, 8
          %s360 = scalar_lea.vmem %s2, %s359
        $region89: #{convolution_layer_forward.2} parent=84 // pred_fallthru
          _
        // Predicated region
        $region90: #{convolution_layer_forward.2} parent=84 // pred_check
          %p361 = pneg %p113
        $region91: #{convolution_layer_forward.2} parent=84 // pred_check_branch
          %363 = sbr.rel (%p361) target = $region93
        $region92: #{convolution_layer_forward.2} parent=84 // pred_region
          %p364 = scmp.lt.s32.totalorder %s17, 3
          %s365 = scalar_select %p364, %s17, 3
          %s366 = smul.addr %s365, 8
          %s367 = scalar_lea.vmem %s3, %s366
        $region93: #{convolution_layer_forward.2} parent=84 // pred_fallthru
          _
        // Predicated region
        $region94: #{convolution_layer_forward.2} parent=84 // pred_check
          %p368 = pneg %p139
        $region95: #{convolution_layer_forward.2} parent=84 // pred_check_branch
          %370 = sbr.rel (%p368) target = $region97
        $region96: #{convolution_layer_forward.2} parent=84 // pred_region
          %p371 = scmp.lt.s32.totalorder %s17, 3
          %s372 = scalar_select %p371, %s17, 3
          %s373 = smul.addr %s372, 8
          %s374 = scalar_lea.vmem %s4, %s373
        $region97: #{convolution_layer_forward.2} parent=84 // pred_fallthru
          _
      $region85: #{convolution_layer_forward.2} parent=5 // pred_fallthru
        _
    $region6: #{convolution_layer_forward.2} parent=1 // loop_footer
      %s15 = sadd.s32 1, %s11
    $region7: #{convolution_layer_forward.2} parent=1 // loop_footer_branch
      %10 = sbr.rel target = $region3
    $region8: #{convolution_layer_forward.2} parent=1 // loop_exit
      _

</llo_original>
